<compile_context>
chip_gen: v7x
topology: tpu7x:2x2x1
jax: 0.10.0
libtpu: 0.0.40
codegen_flags: <defaults>
</compile_context>

<pallas_src>
import jax
import jax.numpy as jnp
from jax.experimental import pallas as pl
from jax.experimental.pallas import tpu as pltpu

_LANE = 128
_OUT_PAD = 8   # 3 -> 8 output columns: narrow full-dim last block, tiny writeback


def _round_up(n, m):
    return ((n + m - 1) // m) * m


def _mlp_kernel(x_ref,
                w1_ref, b1_ref,
                w2_ref, b2_ref,
                w3_ref, b3_ref,
                w4_ref, b4_ref,
                o_ref):
    # x arrives already cast to bf16 by the wrapper (halves the input DMA).
    x = x_ref[...]

    # Layer 1: Linear(D, 128) + ReLU        (bf16 MXU operands, f32 accumulate)
    h = jnp.dot(x, w1_ref[...], preferred_element_type=jnp.float32)
    h = jnp.maximum(h + b1_ref[...], 0.0)

    # Layer 2: Linear(128, 64 -> padded 128) + ReLU
    h = jnp.dot(h.astype(jnp.bfloat16), w2_ref[...],
                preferred_element_type=jnp.float32)
    h = jnp.maximum(h + b2_ref[...], 0.0)

    # Layer 3: Linear(64, 32 -> padded 128) + ReLU
    h = jnp.dot(h.astype(jnp.bfloat16), w3_ref[...],
                preferred_element_type=jnp.float32)
    h = jnp.maximum(h + b3_ref[...], 0.0)

    # Output layer: Linear(32, 3 -> padded 8), no activation.
    o = jnp.dot(h.astype(jnp.bfloat16), w4_ref[...],
                preferred_element_type=jnp.float32)
    o_ref[...] = (o + b4_ref[...]).astype(o_ref.dtype)


def _pad2(a, rows, cols):
    r, c = a.shape
    return jnp.pad(a, ((0, rows - r), (0, cols - c)))


def prepare_params(params):
    """Pad + bf16-cast the weights ONCE (hoisted out of the per-call path)."""
    (w1, b1), (w2, b2), (w3, b3), (w4, b4) = params
    D = w1.shape[0]
    n_out = w4.shape[1]
    h1, h2, h3 = _LANE, _LANE, _LANE         # 128, 64->128, 32->128
    o_pad = _OUT_PAD                         # 3 -> 8

    # Zero padding is exact: padded activations are ReLU(0 + 0) = 0 and the
    # matching zero weight rows contribute nothing downstream.
    weights = (
        _pad2(w1, D,  h1).astype(jnp.bfloat16),
        _pad2(b1, 1,  h1),
        _pad2(w2, h1, h2).astype(jnp.bfloat16),
        _pad2(b2, 1,  h2),
        _pad2(w3, h2, h3).astype(jnp.bfloat16),
        _pad2(b3, 1,  h3),
        _pad2(w4, h3, o_pad).astype(jnp.bfloat16),
        _pad2(b4, 1,  o_pad),
    )
    return {"weights": weights, "n_out": n_out, "input_dim": D}


def url_classifier_forward(x, prepared, *, batch_tile=2048):
    """x: (B, input_dim) float32.  Returns logits (B, 3) float32."""
    w1p, b1p, w2p, b2p, w3p, b3p, w4p, b4p = prepared["weights"]
    n_out = prepared["n_out"]
    B, D = x.shape
    assert D == prepared["input_dim"], (D, prepared["input_dim"])
    o_pad = w4p.shape[1]

    # Batch: pad only to a multiple of 128 and fuse the bf16 cast into the pad.
    # The feature dim is NOT padded (full-dim last block is legal).
    b_pad = _round_up(B, _LANE)
    xp = jnp.pad(x, ((0, b_pad - B), (0, 0))).astype(jnp.bfloat16)

    # Tile selection: big MXU-aligned tiles; keep >= 2 grid steps when the
    # batch allows so the "parallel" axis can shard across v7x's two TCs.
    batch_tile = max(_LANE, _round_up(batch_tile, _LANE))
    tile = min(batch_tile, b_pad)
    if b_pad >= 2 * _LANE and tile >= b_pad:
        tile = _round_up(pl.cdiv(b_pad, 2), _LANE)
    grid = (pl.cdiv(b_pad, tile),)   # last block may be partial (writes clipped)

    full = lambda i: (0, 0)

    # VMEM budget from the actual footprint: double-buffered I/O tiles,
    # (double-buffered) resident weights, live f32 intermediates, plus
    # headroom; capped below v7x's 64 MiB physical VMEM.
    weight_bytes = sum(int(a.size) * a.dtype.itemsize
                       for a in prepared["weights"])
    io_bytes = 2 * tile * D * 2 + 2 * tile * o_pad * 4
    act_bytes = 8 * tile * _LANE * 4
    need = 2 * weight_bytes + io_bytes + act_bytes
    vmem_limit = int(min(need + (8 << 20), 56 << 20))

    out = pl.pallas_call(
        _mlp_kernel,
        out_shape=jax.ShapeDtypeStruct((b_pad, o_pad), jnp.float32),
        grid_spec=pltpu.PrefetchScalarGridSpec(
            num_scalar_prefetch=0,
            grid=grid,
            in_specs=[
                pl.BlockSpec((tile, D), lambda i: (i, 0)),   # bf16 x tile
                pl.BlockSpec(w1p.shape, full),
                pl.BlockSpec(b1p.shape, full),
                pl.BlockSpec(w2p.shape, full),
                pl.BlockSpec(b2p.shape, full),
                pl.BlockSpec(w3p.shape, full),
                pl.BlockSpec(b3p.shape, full),
                pl.BlockSpec(w4p.shape, full),
                pl.BlockSpec(b4p.shape, full),
            ],
            out_specs=pl.BlockSpec((tile, o_pad), lambda i: (i, 0)),
        ),
        compiler_params=pltpu.CompilerParams(
            dimension_semantics=("parallel",),
            vmem_limit_bytes=vmem_limit),
    )(xp, w1p, b1p, w2p, b2p, w3p, b3p, w4p, b4p)

    return out[:B, :n_out]


def init_params(key, input_dim):
    """Deterministic synthetic init matching the nn.Linear shapes.

    PyTorch nn.Linear(in, out) holds weight (out, in); we store the transpose
    (in, out) so the kernel does x @ W + b (identical to x @ weight.T + bias).
    Biases are kept 2D (1, out) for TPU-friendly layout.
    """
    dims = [(input_dim, 128), (128, 64), (64, 32), (32, 3)]
    params = []
    for i, (din, dout) in enumerate(dims):
        kw, kb = jax.random.split(jax.random.fold_in(key, i))
        bound = 1.0 / jnp.sqrt(din)  # same scale as torch's default init
        w = jax.random.uniform(kw, (din, dout), jnp.float32, -bound, bound)
        b = jax.random.uniform(kb, (1, dout), jnp.float32, -bound, bound)
        params.append((w, b))
    return params


def reference_forward(x, params):
    """Plain-JAX (f32) reference of the PyTorch forward pass."""
    (w1, b1), (w2, b2), (w3, b3), (w4, b4) = params
    h = jax.nn.relu(x @ w1 + b1)
    h = jax.nn.relu(h @ w2 + b2)
    h = jax.nn.relu(h @ w3 + b3)
    return h @ w4 + b4


if __name__ == "__main__":
    key = jax.random.PRNGKey(0)
    input_dim = 32
    batch = 16

    kx, kp = jax.random.split(key)
    x = jax.random.normal(kx, (batch, input_dim), jnp.float32)
    params = init_params(kp, input_dim)
    prepared = prepare_params(params)     # one-time weight pad + bf16 cast

    out = jax.block_until_ready(url_classifier_forward(x, prepared))
    ref = reference_forward(x, params)

    assert out.shape == (batch, 3), out.shape
    # bf16 MXU operands with f32 accumulation -> loosened tolerance vs f32 ref.
    assert jnp.allclose(out, ref, atol=5e-2, rtol=5e-2), "mismatch vs reference"

    print("KERNEL_OK")
</pallas_src>

<mosaic_0001>
module attributes {stable_mosaic.version = 11 : i64} {
  func.func @_mlp_kernel(%arg0: i32, %arg1: memref<128x32xbf16, #tpu.memory_space<vmem>>, %arg2: memref<32x128xbf16, #tpu.memory_space<vmem>>, %arg3: memref<1x128xf32, #tpu.memory_space<vmem>>, %arg4: memref<128x128xbf16, #tpu.memory_space<vmem>>, %arg5: memref<1x128xf32, #tpu.memory_space<vmem>>, %arg6: memref<128x128xbf16, #tpu.memory_space<vmem>>, %arg7: memref<1x128xf32, #tpu.memory_space<vmem>>, %arg8: memref<128x8xbf16, #tpu.memory_space<vmem>>, %arg9: memref<1x8xf32, #tpu.memory_space<vmem>>, %arg10: memref<128x8xf32, #tpu.memory_space<vmem>>) attributes {dimension_semantics = [#tpu.dimension_semantics<parallel>], iteration_bounds = array<i64: 1>, scalar_prefetch = 0 : i64, scratch_operands = 0 : i64, tpu.core_type = #tpu.core_type<tc>, window_params = [{transform_indices = @transform_0, window_bounds = array<i64: 128, 32>}, {pipeline_mode = #tpu.pipeline_mode<synchronous>, transform_indices = @transform_1, window_bounds = array<i64: 32, 128>}, {pipeline_mode = #tpu.pipeline_mode<synchronous>, transform_indices = @transform_2, window_bounds = array<i64: 1, 128>}, {pipeline_mode = #tpu.pipeline_mode<synchronous>, transform_indices = @transform_3, window_bounds = array<i64: 128, 128>}, {pipeline_mode = #tpu.pipeline_mode<synchronous>, transform_indices = @transform_4, window_bounds = array<i64: 1, 128>}, {pipeline_mode = #tpu.pipeline_mode<synchronous>, transform_indices = @transform_5, window_bounds = array<i64: 128, 128>}, {pipeline_mode = #tpu.pipeline_mode<synchronous>, transform_indices = @transform_6, window_bounds = array<i64: 1, 128>}, {pipeline_mode = #tpu.pipeline_mode<synchronous>, transform_indices = @transform_7, window_bounds = array<i64: 128, 8>}, {pipeline_mode = #tpu.pipeline_mode<synchronous>, transform_indices = @transform_8, window_bounds = array<i64: 1, 8>}, {transform_indices = @transform_9, window_bounds = array<i64: 128, 8>}]} {
    %c0 = arith.constant 0 : index
    %c0_0 = arith.constant 0 : index
    %0 = vector.load %arg1[%c0, %c0_0] : memref<128x32xbf16, #tpu.memory_space<vmem>>, vector<128x32xbf16>
    %c0_1 = arith.constant 0 : index
    %c0_2 = arith.constant 0 : index
    %1 = vector.load %arg2[%c0_1, %c0_2] : memref<32x128xbf16, #tpu.memory_space<vmem>>, vector<32x128xbf16>
    %cst = arith.constant dense<0.000000e+00> : vector<128x128xf32>
    %2 = tpu.matmul %0, %1, %cst {dimension_numbers = #tpu.dot_dimension_numbers<[1], [0], [0], [1], [0, 0, 1, 1], [], []>} : vector<128x32xbf16>, vector<32x128xbf16>, vector<128x128xf32> -> vector<128x128xf32>
    %c0_3 = arith.constant 0 : index
    %c0_4 = arith.constant 0 : index
    %3 = vector.load %arg3[%c0_3, %c0_4] : memref<1x128xf32, #tpu.memory_space<vmem>>, vector<1x128xf32>
    %4 = vector.broadcast %3 : vector<1x128xf32> to vector<128x128xf32>
    %5 = arith.addf %2, %4 : vector<128x128xf32>
    %cst_5 = arith.constant 0.000000e+00 : f32
    %6 = vector.broadcast %cst_5 : f32 to vector<128x128xf32>
    %7 = arith.maximumf %5, %6 : vector<128x128xf32>
    %8 = arith.truncf %7 : vector<128x128xf32> to vector<128x128xbf16>
    %c0_6 = arith.constant 0 : index
    %c0_7 = arith.constant 0 : index
    %9 = vector.load %arg4[%c0_6, %c0_7] : memref<128x128xbf16, #tpu.memory_space<vmem>>, vector<128x128xbf16>
    %cst_8 = arith.constant dense<0.000000e+00> : vector<128x128xf32>
    %10 = tpu.matmul %8, %9, %cst_8 {dimension_numbers = #tpu.dot_dimension_numbers<[1], [0], [0], [1], [0, 0, 1, 1], [], []>} : vector<128x128xbf16>, vector<128x128xbf16>, vector<128x128xf32> -> vector<128x128xf32>
    %c0_9 = arith.constant 0 : index
    %c0_10 = arith.constant 0 : index
    %11 = vector.load %arg5[%c0_9, %c0_10] : memref<1x128xf32, #tpu.memory_space<vmem>>, vector<1x128xf32>
    %12 = vector.broadcast %11 : vector<1x128xf32> to vector<128x128xf32>
    %13 = arith.addf %10, %12 : vector<128x128xf32>
    %cst_11 = arith.constant 0.000000e+00 : f32
    %14 = vector.broadcast %cst_11 : f32 to vector<128x128xf32>
    %15 = arith.maximumf %13, %14 : vector<128x128xf32>
    %16 = arith.truncf %15 : vector<128x128xf32> to vector<128x128xbf16>
    %c0_12 = arith.constant 0 : index
    %c0_13 = arith.constant 0 : index
    %17 = vector.load %arg6[%c0_12, %c0_13] : memref<128x128xbf16, #tpu.memory_space<vmem>>, vector<128x128xbf16>
    %cst_14 = arith.constant dense<0.000000e+00> : vector<128x128xf32>
    %18 = tpu.matmul %16, %17, %cst_14 {dimension_numbers = #tpu.dot_dimension_numbers<[1], [0], [0], [1], [0, 0, 1, 1], [], []>} : vector<128x128xbf16>, vector<128x128xbf16>, vector<128x128xf32> -> vector<128x128xf32>
    %c0_15 = arith.constant 0 : index
    %c0_16 = arith.constant 0 : index
    %19 = vector.load %arg7[%c0_15, %c0_16] : memref<1x128xf32, #tpu.memory_space<vmem>>, vector<1x128xf32>
    %20 = vector.broadcast %19 : vector<1x128xf32> to vector<128x128xf32>
    %21 = arith.addf %18, %20 : vector<128x128xf32>
    %cst_17 = arith.constant 0.000000e+00 : f32
    %22 = vector.broadcast %cst_17 : f32 to vector<128x128xf32>
    %23 = arith.maximumf %21, %22 : vector<128x128xf32>
    %24 = arith.truncf %23 : vector<128x128xf32> to vector<128x128xbf16>
    %c0_18 = arith.constant 0 : index
    %c0_19 = arith.constant 0 : index
    %25 = vector.load %arg8[%c0_18, %c0_19] : memref<128x8xbf16, #tpu.memory_space<vmem>>, vector<128x8xbf16>
    %cst_20 = arith.constant dense<0.000000e+00> : vector<128x8xf32>
    %26 = tpu.matmul %24, %25, %cst_20 {dimension_numbers = #tpu.dot_dimension_numbers<[1], [0], [0], [1], [0, 0, 1, 1], [], []>} : vector<128x128xbf16>, vector<128x8xbf16>, vector<128x8xf32> -> vector<128x8xf32>
    %c0_21 = arith.constant 0 : index
    %c0_22 = arith.constant 0 : index
    %27 = vector.load %arg9[%c0_21, %c0_22] : memref<1x8xf32, #tpu.memory_space<vmem>>, vector<1x8xf32>
    %28 = vector.broadcast %27 : vector<1x8xf32> to vector<128x8xf32>
    %29 = arith.addf %26, %28 : vector<128x8xf32>
    %c0_23 = arith.constant 0 : index
    %c0_24 = arith.constant 0 : index
    %30 = vector.load %arg10[%c0_23, %c0_24] : memref<128x8xf32, #tpu.memory_space<vmem>>, vector<128x8xf32>
    tpu.vector_store %arg10[%c0_23, %c0_24], %29 {strides = array<i32>} : memref<128x8xf32, #tpu.memory_space<vmem>>, vector<128x8xf32>,
    return
  }
  func.func @transform_0(%arg0: i32) -> (i32, i32) {
    %c0_i32 = arith.constant 0 : i32
    %c0_i32_0 = arith.constant 0 : i32
    return %arg0, %c0_i32 : i32, i32
  }
  func.func @transform_1(%arg0: i32) -> (i32, i32) {
    %c0_i32 = arith.constant 0 : i32
    %c0_i32_0 = arith.constant 0 : i32
    %c0_i32_1 = arith.constant 0 : i32
    return %c0_i32, %c0_i32_0 : i32, i32
  }
  func.func @transform_2(%arg0: i32) -> (i32, i32) {
    %c0_i32 = arith.constant 0 : i32
    %c0_i32_0 = arith.constant 0 : i32
    %c0_i32_1 = arith.constant 0 : i32
    return %c0_i32, %c0_i32_0 : i32, i32
  }
  func.func @transform_3(%arg0: i32) -> (i32, i32) {
    %c0_i32 = arith.constant 0 : i32
    %c0_i32_0 = arith.constant 0 : i32
    %c0_i32_1 = arith.constant 0 : i32
    return %c0_i32, %c0_i32_0 : i32, i32
  }
  func.func @transform_4(%arg0: i32) -> (i32, i32) {
    %c0_i32 = arith.constant 0 : i32
    %c0_i32_0 = arith.constant 0 : i32
    %c0_i32_1 = arith.constant 0 : i32
    return %c0_i32, %c0_i32_0 : i32, i32
  }
  func.func @transform_5(%arg0: i32) -> (i32, i32) {
    %c0_i32 = arith.constant 0 : i32
    %c0_i32_0 = arith.constant 0 : i32
    %c0_i32_1 = arith.constant 0 : i32
    return %c0_i32, %c0_i32_0 : i32, i32
  }
  func.func @transform_6(%arg0: i32) -> (i32, i32) {
    %c0_i32 = arith.constant 0 : i32
    %c0_i32_0 = arith.constant 0 : i32
    %c0_i32_1 = arith.constant 0 : i32
    return %c0_i32, %c0_i32_0 : i32, i32
  }
  func.func @transform_7(%arg0: i32) -> (i32, i32) {
    %c0_i32 = arith.constant 0 : i32
    %c0_i32_0 = arith.constant 0 : i32
    %c0_i32_1 = arith.constant 0 : i32
    return %c0_i32, %c0_i32_0 : i32, i32
  }
  func.func @transform_8(%arg0: i32) -> (i32, i32) {
    %c0_i32 = arith.constant 0 : i32
    %c0_i32_0 = arith.constant 0 : i32
    %c0_i32_1 = arith.constant 0 : i32
    return %c0_i32, %c0_i32_0 : i32, i32
  }
  func.func @transform_9(%arg0: i32) -> (i32, i32) {
    %c0_i32 = arith.constant 0 : i32
    %c0_i32_0 = arith.constant 0 : i32
    return %arg0, %c0_i32 : i32, i32
  }
}

</mosaic_0001>

<llo_original>
// kernel: tpu_custom_call.1
$region0: #{tpu_custom_call.1}
  #allocation0 [shape = 'u32[]', space=smem, size = 0x4, offset = 0x4, fixed_abs, tag = 'smem constant byte address 0x4 - core index']
  #allocation1 [shape = 'u32[144,128]{1,0:T(1,128)}', space=vmem, size = 0x12000, scoped, tag = 'internal scratch']
  %s0 = inlined_call_operand.vmem [shape: bf16[128,32], index: 0, kind: input, shape index: {}]
  %s1 = inlined_call_operand.vmem [shape: bf16[32,128], index: 1, kind: input, shape index: {}]
  %s2 = inlined_call_operand.vmem [shape: f32[1,128], index: 2, kind: input, shape index: {}]
  %s3 = inlined_call_operand.vmem [shape: bf16[128,128], index: 3, kind: input, shape index: {}]
  %s4 = inlined_call_operand.vmem [shape: f32[1,128], index: 4, kind: input, shape index: {}]
  %s5 = inlined_call_operand.vmem [shape: bf16[128,128], index: 5, kind: input, shape index: {}]
  %s6 = inlined_call_operand.vmem [shape: f32[1,128], index: 6, kind: input, shape index: {}]
  %s7 = inlined_call_operand.vmem [shape: bf16[128,8], index: 7, kind: input, shape index: {}]
  %s8 = inlined_call_operand.vmem [shape: f32[1,8], index: 8, kind: input, shape index: {}]
  %s9 = inlined_call_operand.vmem [shape: f32[128,8], index: 9, kind: output, shape index: {}]
  %s10 = sld [smem:[#allocation0]]
  $region46: #{tpu_custom_call.1} parent=0
    _
  %s12 = ssub.s32 1, %s10
  %s13 = scalar_select 0, %s12, %s10
  // Predicated region
  $region2: #{tpu_custom_call.1} parent=0 // pred_check
    _
  $region3: #{tpu_custom_call.1} parent=0 // pred_check_branch
    %15 = sbr.rel (0) target = $region5
  $region4: #{tpu_custom_call.1} parent=0 // pred_region
    _
  $region5: #{tpu_custom_call.1} parent=0 // pred_fallthru
    _
  // Predicated region
  $region6: #{tpu_custom_call.1} parent=0 // pred_check
    _
  $region7: #{tpu_custom_call.1} parent=0 // pred_check_branch
    %17 = sbr.rel (0) target = $region9
  $region8: #{tpu_custom_call.1} parent=0 // pred_region
    _
  $region9: #{tpu_custom_call.1} parent=0 // pred_fallthru
    _
  // Predicated region
  $region10: #{tpu_custom_call.1} parent=0 // pred_check
    _
  $region11: #{tpu_custom_call.1} parent=0 // pred_check_branch
    %19 = sbr.rel (0) target = $region13
  $region12: #{tpu_custom_call.1} parent=0 // pred_region
    _
  $region13: #{tpu_custom_call.1} parent=0 // pred_fallthru
    _
  // Predicated region
  $region14: #{tpu_custom_call.1} parent=0 // pred_check
    _
  $region15: #{tpu_custom_call.1} parent=0 // pred_check_branch
    %21 = sbr.rel (0) target = $region17
  $region16: #{tpu_custom_call.1} parent=0 // pred_region
    _
  $region17: #{tpu_custom_call.1} parent=0 // pred_fallthru
    _
  // Predicated region
  $region18: #{tpu_custom_call.1} parent=0 // pred_check
    _
  $region19: #{tpu_custom_call.1} parent=0 // pred_check_branch
    %23 = sbr.rel (0) target = $region21
  $region20: #{tpu_custom_call.1} parent=0 // pred_region
    _
  $region21: #{tpu_custom_call.1} parent=0 // pred_fallthru
    _
  // Predicated region
  $region22: #{tpu_custom_call.1} parent=0 // pred_check
    _
  $region23: #{tpu_custom_call.1} parent=0 // pred_check_branch
    %25 = sbr.rel (0) target = $region25
  $region24: #{tpu_custom_call.1} parent=0 // pred_region
    _
  $region25: #{tpu_custom_call.1} parent=0 // pred_fallthru
    _
  // Predicated region
  $region26: #{tpu_custom_call.1} parent=0 // pred_check
    _
  $region27: #{tpu_custom_call.1} parent=0 // pred_check_branch
    %27 = sbr.rel (0) target = $region29
  $region28: #{tpu_custom_call.1} parent=0 // pred_region
    _
  $region29: #{tpu_custom_call.1} parent=0 // pred_fallthru
    _
  // Predicated region
  $region30: #{tpu_custom_call.1} parent=0 // pred_check
    _
  $region31: #{tpu_custom_call.1} parent=0 // pred_check_branch
    %29 = sbr.rel (0) target = $region33
  $region32: #{tpu_custom_call.1} parent=0 // pred_region
    _
  $region33: #{tpu_custom_call.1} parent=0 // pred_fallthru
    _
  // Predicated region
  $region34: #{tpu_custom_call.1} parent=0 // pred_check
    _
  $region35: #{tpu_custom_call.1} parent=0 // pred_check_branch
    %31 = sbr.rel (0) target = $region37
  $region36: #{tpu_custom_call.1} parent=0 // pred_region
    _
  $region37: #{tpu_custom_call.1} parent=0 // pred_fallthru
    _
  %v33 = vld [vmem:[%s0] sm:$0xf]
  %v34 = vld [vmem:[%s0 + $0x4] sm:$0xf]
  %v35 = vld [vmem:[%s0 + $0x8] sm:$0xf]
  %v36 = vld [vmem:[%s0 + $0xc] sm:$0xf]
  %v37 = vld [vmem:[%s0 + $0x10] sm:$0xf]
  %v38 = vld [vmem:[%s0 + $0x14] sm:$0xf]
  %v39 = vld [vmem:[%s0 + $0x18] sm:$0xf]
  %v40 = vld [vmem:[%s0 + $0x1c] sm:$0xf]
  %v41 = vld [vmem:[%s0 + $0x20] sm:$0xf]
  %v42 = vld [vmem:[%s0 + $0x24] sm:$0xf]
  %v43 = vld [vmem:[%s0 + $0x28] sm:$0xf]
  %v44 = vld [vmem:[%s0 + $0x2c] sm:$0xf]
  %v45 = vld [vmem:[%s0 + $0x30] sm:$0xf]
  %v46 = vld [vmem:[%s0 + $0x34] sm:$0xf]
  %v47 = vld [vmem:[%s0 + $0x38] sm:$0xf]
  %v48 = vld [vmem:[%s0 + $0x3c] sm:$0xf]
  %v49 = vld [vmem:[%s1] sm:$0xf]
  %v50 = vld [vmem:[%s1 + $0x4] sm:$0xf]
  %v51 = vld [vmem:[%s1 + $0x8] sm:$0xf]
  %v52 = vld [vmem:[%s1 + $0xc] sm:$0xf]
  %v53 = vld [vmem:[%s2] sm:$0x1]
  %v55 = vlaneseq
  %v56 = vshrl.u32 %v55, 7
  %v57 = vsub.s32 0, %v56
  %v58 = vrot.slane %v53, %v57
  %v76 = vunpack.c.l.b16 %v33
  %v77 = vunpack.c.l.b16 %v34
  %v78 = vunpack.c.l.b16 %v35
  %v79 = vunpack.c.l.b16 %v36
  %v80 = vunpack.c.l.b16 %v37
  %v81 = vunpack.c.l.b16 %v38
  %v82 = vunpack.c.l.b16 %v39
  %v83 = vunpack.c.l.b16 %v40
  %v84 = vunpack.c.l.b16 %v41
  %v85 = vunpack.c.l.b16 %v42
  %v86 = vunpack.c.l.b16 %v43
  %v87 = vunpack.c.l.b16 %v44
  %v88 = vunpack.c.l.b16 %v45
  %v89 = vunpack.c.l.b16 %v46
  %v90 = vunpack.c.l.b16 %v47
  %v91 = vunpack.c.l.b16 %v48
  %v92 = vpack.c.b16 %v77, %v76
  %v93 = vpack.c.b16 %v79, %v78
  %v94 = vpack.c.b16 %v81, %v80
  %v95 = vpack.c.b16 %v83, %v82
  %v96 = vpack.c.b16 %v85, %v84
  %v97 = vpack.c.b16 %v87, %v86
  %v98 = vpack.c.b16 %v89, %v88
  %v99 = vpack.c.b16 %v91, %v90
  %v104 = vunpack.c.l.b16 %v49
  %v105 = vunpack.c.l.b16 %v50
  %v106 = vunpack.c.l.b16 %v51
  %v107 = vunpack.c.l.b16 %v52
  %v108 = vpack.c.b16 %v105, %v104
  %v109 = vpack.c.b16 %v107, %v106
  %vm112 = vcmask 261120
  %v114 = vsel %vm112, %v92, 0
  %v117 = vsel %vm112, %v93, 0
  %v120 = vsel %vm112, %v94, 0
  %v123 = vsel %vm112, %v95, 0
  %v126 = vsel %vm112, %v96, 0
  %v129 = vsel %vm112, %v97, 0
  %v132 = vsel %vm112, %v98, 0
  %v135 = vsel %vm112, %v99, 0
  %137 = vmatprep.subr.bf16.mxu0 0
  %138 = vmatpush1.bf16.msra.mxu0 %v108
  %139 = vmatprep.subr.bf16.mxu0 0
  %140 = vmatpush1.bf16.msra.mxu0 %v109
  %141 = vmatprep.subr.bf16.mxu0 0
  %142 = vmatpush1.bf16.msra.mxu0 0
  %143 = vmatprep.subr.bf16.mxu0 0
  %144 = vmatpush1.bf16.msra.mxu0 0
  %145 = vmatprep.subr.bf16.mxu0 0
  %146 = vmatpush1.bf16.msra.mxu0 0
  %147 = vmatprep.subr.bf16.mxu0 0
  %148 = vmatpush1.bf16.msra.mxu0 0
  %149 = vmatprep.subr.bf16.mxu0 0
  %150 = vmatpush1.bf16.msra.mxu0 0
  %151 = vmatprep.subr.bf16.mxu0 0
  %152 = vmatpush1.bf16.msra.mxu0 0
  %153 = vmatprep.subr.bf16.mxu0 0
  %154 = vmatpush1.bf16.msra.mxu0 0
  %155 = vmatprep.subr.bf16.mxu0 0
  %156 = vmatpush1.bf16.msra.mxu0 0
  %157 = vmatprep.subr.bf16.mxu0 0
  %158 = vmatpush1.bf16.msra.mxu0 0
  %159 = vmatprep.subr.bf16.mxu0 0
  %160 = vmatpush1.bf16.msra.mxu0 0
  %161 = vmatprep.subr.bf16.mxu0 0
  %162 = vmatpush1.bf16.msra.mxu0 0
  %163 = vmatprep.subr.bf16.mxu0 0
  %164 = vmatpush1.bf16.msra.mxu0 0
  %165 = vmatprep.subr.bf16.mxu0 0
  %166 = vmatpush1.bf16.msra.mxu0 0
  %167 = vmatprep.subr.bf16.mxu0 0
  %168 = vmatpush1.bf16.msra.mxu0 0
  %169 = vmatprep.mubr.bf16.mxu0 0
  %170 = vmatmul.mubr.bf16.gmra.mrb[0].mxu0 %v114
  %v171 = vpop.f32.mrb[0].mxu0
  %v172 = vadd.f32 %v58, %v171
  %v173 = vpop.f32.mrb[0].mxu0
  %v174 = vpop.f32.mrb[0].mxu0
  %v175 = vadd.f32 %v58, %v174
  %v176 = vpop.f32.mrb[0].mxu0
  %177 = vmatprep.mubr.bf16.mxu0 0
  %178 = vmatmul.mubr.bf16.gmra.mrb[0].mxu0 %v117
  %v179 = vpop.f32.mrb[0].mxu0
  %v180 = vadd.f32 %v58, %v179
  %v181 = vpop.f32.mrb[0].mxu0
  %v182 = vpop.f32.mrb[0].mxu0
  %v183 = vadd.f32 %v58, %v182
  %v184 = vpop.f32.mrb[0].mxu0
  %185 = vmatprep.mubr.bf16.mxu0 0
  %186 = vmatmul.mubr.bf16.gmra.mrb[0].mxu0 %v120
  %v187 = vpop.f32.mrb[0].mxu0
  %v188 = vadd.f32 %v58, %v187
  %v189 = vpop.f32.mrb[0].mxu0
  %v190 = vpop.f32.mrb[0].mxu0
  %v191 = vadd.f32 %v58, %v190
  %v192 = vpop.f32.mrb[0].mxu0
  %193 = vmatprep.mubr.bf16.mxu0 0
  %194 = vmatmul.mubr.bf16.gmra.mrb[0].mxu0 %v123
  %v195 = vpop.f32.mrb[0].mxu0
  %v196 = vadd.f32 %v58, %v195
  %v197 = vpop.f32.mrb[0].mxu0
  %v198 = vpop.f32.mrb[0].mxu0
  %v199 = vadd.f32 %v58, %v198
  %v200 = vpop.f32.mrb[0].mxu0
  %201 = vmatprep.mubr.bf16.mxu0 0
  %202 = vmatmul.mubr.bf16.gmra.mrb[0].mxu0 %v126
  %v203 = vpop.f32.mrb[0].mxu0
  %v204 = vadd.f32 %v58, %v203
  %v205 = vpop.f32.mrb[0].mxu0
  %v206 = vpop.f32.mrb[0].mxu0
  %v207 = vadd.f32 %v58, %v206
  %v208 = vpop.f32.mrb[0].mxu0
  %209 = vmatprep.mubr.bf16.mxu0 0
  %210 = vmatmul.mubr.bf16.gmra.mrb[0].mxu0 %v129
  %v211 = vpop.f32.mrb[0].mxu0
  %v212 = vadd.f32 %v58, %v211
  %v213 = vpop.f32.mrb[0].mxu0
  %v214 = vpop.f32.mrb[0].mxu0
  %v215 = vadd.f32 %v58, %v214
  %v216 = vpop.f32.mrb[0].mxu0
  %217 = vmatprep.mubr.bf16.mxu0 0
  %218 = vmatmul.mubr.bf16.gmra.mrb[0].mxu0 %v132
  %v219 = vpop.f32.mrb[0].mxu0
  %v220 = vadd.f32 %v58, %v219
  %v221 = vpop.f32.mrb[0].mxu0
  %v222 = vpop.f32.mrb[0].mxu0
  %v223 = vadd.f32 %v58, %v222
  %v224 = vpop.f32.mrb[0].mxu0
  %225 = vmatprep.mubr.bf16.mxu0 0
  %226 = vmatmul.mubr.bf16.gmra.mrb[0].mxu0 %v135
  %v227 = vpop.f32.mrb[0].mxu0
  %v228 = vadd.f32 %v58, %v227
  %v229 = vpop.f32.mrb[0].mxu0
  %v230 = vpop.f32.mrb[0].mxu0
  %v231 = vadd.f32 %v58, %v230
  %v232 = vpop.f32.mrb[0].mxu0
  %233 = vdwg.mxu0
  %v234 = vmax.f32 %v172, 0.0
  %v235 = vmax.f32 %v175, 0.0
  %v236 = vmax.f32 %v180, 0.0
  %v237 = vmax.f32 %v183, 0.0
  %v238 = vmax.f32 %v188, 0.0
  %v239 = vmax.f32 %v191, 0.0
  %v240 = vmax.f32 %v196, 0.0
  %v241 = vmax.f32 %v199, 0.0
  %v242 = vmax.f32 %v204, 0.0
  %v243 = vmax.f32 %v207, 0.0
  %v244 = vmax.f32 %v212, 0.0
  %v245 = vmax.f32 %v215, 0.0
  %v246 = vmax.f32 %v220, 0.0
  %v247 = vmax.f32 %v223, 0.0
  %v248 = vmax.f32 %v228, 0.0
  %v249 = vmax.f32 %v231, 0.0
  %v250 = vpack.c.bf16 %v235, %v234
  %v251 = vpack.c.bf16 %v237, %v236
  %v252 = vpack.c.bf16 %v239, %v238
  %v253 = vpack.c.bf16 %v241, %v240
  %v254 = vpack.c.bf16 %v243, %v242
  %v255 = vpack.c.bf16 %v245, %v244
  %v256 = vpack.c.bf16 %v247, %v246
  %v257 = vpack.c.bf16 %v249, %v248
  %v258 = vld [vmem:[%s3] sm:$0xf]
  %v259 = vld [vmem:[%s3 + $0x4] sm:$0xf]
  %v260 = vld [vmem:[%s3 + $0x8] sm:$0xf]
  %v261 = vld [vmem:[%s3 + $0xc] sm:$0xf]
  %v262 = vld [vmem:[%s3 + $0x10] sm:$0xf]
  %v263 = vld [vmem:[%s3 + $0x14] sm:$0xf]
  %v264 = vld [vmem:[%s3 + $0x18] sm:$0xf]
  %v265 = vld [vmem:[%s3 + $0x1c] sm:$0xf]
  %v266 = vld [vmem:[%s3 + $0x20] sm:$0xf]
  %v267 = vld [vmem:[%s3 + $0x24] sm:$0xf]
  %v268 = vld [vmem:[%s3 + $0x28] sm:$0xf]
  %v269 = vld [vmem:[%s3 + $0x2c] sm:$0xf]
  %v270 = vld [vmem:[%s3 + $0x30] sm:$0xf]
  %v271 = vld [vmem:[%s3 + $0x34] sm:$0xf]
  %v272 = vld [vmem:[%s3 + $0x38] sm:$0xf]
  %v273 = vld [vmem:[%s3 + $0x3c] sm:$0xf]
  %v274 = vld [vmem:[%s4] sm:$0x1]
  %v276 = vlaneseq
  %v277 = vshrl.u32 %v276, 7
  %v278 = vsub.s32 0, %v277
  %v279 = vrot.slane %v274, %v278
  %v297 = vunpack.c.l.b16 %v258
  %v298 = vunpack.c.l.b16 %v259
  %v299 = vunpack.c.l.b16 %v260
  %v300 = vunpack.c.l.b16 %v261
  %v301 = vunpack.c.l.b16 %v262
  %v302 = vunpack.c.l.b16 %v263
  %v303 = vunpack.c.l.b16 %v264
  %v304 = vunpack.c.l.b16 %v265
  %v305 = vunpack.c.l.b16 %v266
  %v306 = vunpack.c.l.b16 %v267
  %v307 = vunpack.c.l.b16 %v268
  %v308 = vunpack.c.l.b16 %v269
  %v309 = vunpack.c.l.b16 %v270
  %v310 = vunpack.c.l.b16 %v271
  %v311 = vunpack.c.l.b16 %v272
  %v312 = vunpack.c.l.b16 %v273
  %v313 = vpack.c.b16 %v298, %v297
  %v314 = vpack.c.b16 %v300, %v299
  %v315 = vpack.c.b16 %v302, %v301
  %v316 = vpack.c.b16 %v304, %v303
  %v317 = vpack.c.b16 %v306, %v305
  %v318 = vpack.c.b16 %v308, %v307
  %v319 = vpack.c.b16 %v310, %v309
  %v320 = vpack.c.b16 %v312, %v311
  %329 = vmatprep.subr.bf16.mxu0 0
  %330 = vmatpush1.bf16.msra.mxu0 %v313
  %331 = vmatprep.subr.bf16.mxu0 0
  %332 = vmatpush1.bf16.msra.mxu0 %v314
  %333 = vmatprep.subr.bf16.mxu0 0
  %334 = vmatpush1.bf16.msra.mxu0 %v315
  %335 = vmatprep.subr.bf16.mxu0 0
  %336 = vmatpush1.bf16.msra.mxu0 %v316
  %337 = vmatprep.subr.bf16.mxu0 0
  %338 = vmatpush1.bf16.msra.mxu0 %v317
  %339 = vmatprep.subr.bf16.mxu0 0
  %340 = vmatpush1.bf16.msra.mxu0 %v318
  %341 = vmatprep.subr.bf16.mxu0 0
  %342 = vmatpush1.bf16.msra.mxu0 %v319
  %343 = vmatprep.subr.bf16.mxu0 0
  %344 = vmatpush1.bf16.msra.mxu0 %v320
  %345 = vmatprep.subr.bf16.mxu0 0
  %346 = vmatpush1.bf16.msra.mxu0 0
  %347 = vmatprep.subr.bf16.mxu0 0
  %348 = vmatpush1.bf16.msra.mxu0 0
  %349 = vmatprep.subr.bf16.mxu0 0
  %350 = vmatpush1.bf16.msra.mxu0 0
  %351 = vmatprep.subr.bf16.mxu0 0
  %352 = vmatpush1.bf16.msra.mxu0 0
  %353 = vmatprep.subr.bf16.mxu0 0
  %354 = vmatpush1.bf16.msra.mxu0 0
  %355 = vmatprep.subr.bf16.mxu0 0
  %356 = vmatpush1.bf16.msra.mxu0 0
  %357 = vmatprep.subr.bf16.mxu0 0
  %358 = vmatpush1.bf16.msra.mxu0 0
  %359 = vmatprep.subr.bf16.mxu0 0
  %360 = vmatpush1.bf16.msra.mxu0 0
  %361 = vmatprep.mubr.bf16.mxu0 0
  %362 = vmatmul.mubr.bf16.gmra.mrb[0].mxu0 %v250
  %v363 = vpop.f32.mrb[0].mxu0
  %v364 = vadd.f32 %v279, %v363
  %v365 = vpop.f32.mrb[0].mxu0
  %v366 = vpop.f32.mrb[0].mxu0
  %v367 = vadd.f32 %v279, %v366
  %v368 = vpop.f32.mrb[0].mxu0
  %369 = vmatprep.mubr.bf16.mxu0 0
  %370 = vmatmul.mubr.bf16.gmra.mrb[0].mxu0 %v251
  %v371 = vpop.f32.mrb[0].mxu0
  %v372 = vadd.f32 %v279, %v371
  %v373 = vpop.f32.mrb[0].mxu0
  %v374 = vpop.f32.mrb[0].mxu0
  %v375 = vadd.f32 %v279, %v374
  %v376 = vpop.f32.mrb[0].mxu0
  %377 = vmatprep.mubr.bf16.mxu0 0
  %378 = vmatmul.mubr.bf16.gmra.mrb[0].mxu0 %v252
  %v379 = vpop.f32.mrb[0].mxu0
  %v380 = vadd.f32 %v279, %v379
  %v381 = vpop.f32.mrb[0].mxu0
  %v382 = vpop.f32.mrb[0].mxu0
  %v383 = vadd.f32 %v279, %v382
  %v384 = vpop.f32.mrb[0].mxu0
  %385 = vmatprep.mubr.bf16.mxu0 0
  %386 = vmatmul.mubr.bf16.gmra.mrb[0].mxu0 %v253
  %v387 = vpop.f32.mrb[0].mxu0
  %v388 = vadd.f32 %v279, %v387
  %v389 = vpop.f32.mrb[0].mxu0
  %v390 = vpop.f32.mrb[0].mxu0
  %v391 = vadd.f32 %v279, %v390
  %v392 = vpop.f32.mrb[0].mxu0
  %393 = vmatprep.mubr.bf16.mxu0 0
  %394 = vmatmul.mubr.bf16.gmra.mrb[0].mxu0 %v254
  %v395 = vpop.f32.mrb[0].mxu0
  %v396 = vadd.f32 %v279, %v395
  %v397 = vpop.f32.mrb[0].mxu0
  %v398 = vpop.f32.mrb[0].mxu0
  %v399 = vadd.f32 %v279, %v398
  %v400 = vpop.f32.mrb[0].mxu0
  %401 = vmatprep.mubr.bf16.mxu0 0
  %402 = vmatmul.mubr.bf16.gmra.mrb[0].mxu0 %v255
  %v403 = vpop.f32.mrb[0].mxu0
  %v404 = vadd.f32 %v279, %v403
  %v405 = vpop.f32.mrb[0].mxu0
  %v406 = vpop.f32.mrb[0].mxu0
  %v407 = vadd.f32 %v279, %v406
  %v408 = vpop.f32.mrb[0].mxu0
  %409 = vmatprep.mubr.bf16.mxu0 0
  %410 = vmatmul.mubr.bf16.gmra.mrb[0].mxu0 %v256
  %v411 = vpop.f32.mrb[0].mxu0
  %v412 = vadd.f32 %v279, %v411
  %v413 = vpop.f32.mrb[0].mxu0
  %v414 = vpop.f32.mrb[0].mxu0
  %v415 = vadd.f32 %v279, %v414
  %v416 = vpop.f32.mrb[0].mxu0
  %417 = vmatprep.mubr.bf16.mxu0 0
  %418 = vmatmul.mubr.bf16.gmra.mrb[0].mxu0 %v257
  %v419 = vpop.f32.mrb[0].mxu0
  %v420 = vadd.f32 %v279, %v419
  %v421 = vpop.f32.mrb[0].mxu0
  %v422 = vpop.f32.mrb[0].mxu0
  %v423 = vadd.f32 %v279, %v422
  %v424 = vpop.f32.mrb[0].mxu0
  %425 = vdwg.mxu0
  %v426 = vmax.f32 %v364, 0.0
  %v427 = vmax.f32 %v367, 0.0
  %v428 = vmax.f32 %v372, 0.0
  %v429 = vmax.f32 %v375, 0.0
  %v430 = vmax.f32 %v380, 0.0
  %v431 = vmax.f32 %v383, 0.0
  %v432 = vmax.f32 %v388, 0.0
  %v433 = vmax.f32 %v391, 0.0
  %v434 = vmax.f32 %v396, 0.0
  %v435 = vmax.f32 %v399, 0.0
  %v436 = vmax.f32 %v404, 0.0
  %v437 = vmax.f32 %v407, 0.0
  %v438 = vmax.f32 %v412, 0.0
  %v439 = vmax.f32 %v415, 0.0
  %v440 = vmax.f32 %v420, 0.0
  %v441 = vmax.f32 %v423, 0.0
  %v442 = vpack.c.bf16 %v427, %v426
  %v443 = vpack.c.bf16 %v429, %v428
  %v444 = vpack.c.bf16 %v431, %v430
  %v445 = vpack.c.bf16 %v433, %v432
  %v446 = vpack.c.bf16 %v435, %v434
  %v447 = vpack.c.bf16 %v437, %v436
  %v448 = vpack.c.bf16 %v439, %v438
  %v449 = vpack.c.bf16 %v441, %v440
  %v450 = vld [vmem:[%s5] sm:$0xf]
  %v451 = vld [vmem:[%s5 + $0x4] sm:$0xf]
  %v452 = vld [vmem:[%s5 + $0x8] sm:$0xf]
  %v453 = vld [vmem:[%s5 + $0xc] sm:$0xf]
  %v454 = vld [vmem:[%s5 + $0x10] sm:$0xf]
  %v455 = vld [vmem:[%s5 + $0x14] sm:$0xf]
  %v456 = vld [vmem:[%s5 + $0x18] sm:$0xf]
  %v457 = vld [vmem:[%s5 + $0x1c] sm:$0xf]
  %v458 = vld [vmem:[%s5 + $0x20] sm:$0xf]
  %v459 = vld [vmem:[%s5 + $0x24] sm:$0xf]
  %v460 = vld [vmem:[%s5 + $0x28] sm:$0xf]
  %v461 = vld [vmem:[%s5 + $0x2c] sm:$0xf]
  %v462 = vld [vmem:[%s5 + $0x30] sm:$0xf]
  %v463 = vld [vmem:[%s5 + $0x34] sm:$0xf]
  %v464 = vld [vmem:[%s5 + $0x38] sm:$0xf]
  %v465 = vld [vmem:[%s5 + $0x3c] sm:$0xf]
  %v466 = vld [vmem:[%s6] sm:$0x1]
  %v468 = vlaneseq
  %v469 = vshrl.u32 %v468, 7
  %v470 = vsub.s32 0, %v469
  %v471 = vrot.slane %v466, %v470
  %v489 = vunpack.c.l.b16 %v450
  %v490 = vunpack.c.l.b16 %v451
  %v491 = vunpack.c.l.b16 %v452
  %v492 = vunpack.c.l.b16 %v453
  %v493 = vunpack.c.l.b16 %v454
  %v494 = vunpack.c.l.b16 %v455
  %v495 = vunpack.c.l.b16 %v456
  %v496 = vunpack.c.l.b16 %v457
  %v497 = vunpack.c.l.b16 %v458
  %v498 = vunpack.c.l.b16 %v459
  %v499 = vunpack.c.l.b16 %v460
  %v500 = vunpack.c.l.b16 %v461
  %v501 = vunpack.c.l.b16 %v462
  %v502 = vunpack.c.l.b16 %v463
  %v503 = vunpack.c.l.b16 %v464
  %v504 = vunpack.c.l.b16 %v465
  %v505 = vpack.c.b16 %v490, %v489
  %v506 = vpack.c.b16 %v492, %v491
  %v507 = vpack.c.b16 %v494, %v493
  %v508 = vpack.c.b16 %v496, %v495
  %v509 = vpack.c.b16 %v498, %v497
  %v510 = vpack.c.b16 %v500, %v499
  %v511 = vpack.c.b16 %v502, %v501
  %v512 = vpack.c.b16 %v504, %v503
  %521 = vmatprep.subr.bf16.mxu0 0
  %522 = vmatpush1.bf16.msra.mxu0 %v505
  %523 = vmatprep.subr.bf16.mxu0 0
  %524 = vmatpush1.bf16.msra.mxu0 %v506
  %525 = vmatprep.subr.bf16.mxu0 0
  %526 = vmatpush1.bf16.msra.mxu0 %v507
  %527 = vmatprep.subr.bf16.mxu0 0
  %528 = vmatpush1.bf16.msra.mxu0 %v508
  %529 = vmatprep.subr.bf16.mxu0 0
  %530 = vmatpush1.bf16.msra.mxu0 %v509
  %531 = vmatprep.subr.bf16.mxu0 0
  %532 = vmatpush1.bf16.msra.mxu0 %v510
  %533 = vmatprep.subr.bf16.mxu0 0
  %534 = vmatpush1.bf16.msra.mxu0 %v511
  %535 = vmatprep.subr.bf16.mxu0 0
  %536 = vmatpush1.bf16.msra.mxu0 %v512
  %537 = vmatprep.subr.bf16.mxu0 0
  %538 = vmatpush1.bf16.msra.mxu0 0
  %539 = vmatprep.subr.bf16.mxu0 0
  %540 = vmatpush1.bf16.msra.mxu0 0
  %541 = vmatprep.subr.bf16.mxu0 0
  %542 = vmatpush1.bf16.msra.mxu0 0
  %543 = vmatprep.subr.bf16.mxu0 0
  %544 = vmatpush1.bf16.msra.mxu0 0
  %545 = vmatprep.subr.bf16.mxu0 0
  %546 = vmatpush1.bf16.msra.mxu0 0
  %547 = vmatprep.subr.bf16.mxu0 0
  %548 = vmatpush1.bf16.msra.mxu0 0
  %549 = vmatprep.subr.bf16.mxu0 0
  %550 = vmatpush1.bf16.msra.mxu0 0
  %551 = vmatprep.subr.bf16.mxu0 0
  %552 = vmatpush1.bf16.msra.mxu0 0
  %553 = vmatprep.mubr.bf16.mxu0 0
  %554 = vmatmul.mubr.bf16.gmra.mrb[0].mxu0 %v442
  %v555 = vpop.f32.mrb[0].mxu0
  %v556 = vadd.f32 %v471, %v555
  %v557 = vpop.f32.mrb[0].mxu0
  %v558 = vpop.f32.mrb[0].mxu0
  %v559 = vadd.f32 %v471, %v558
  %v560 = vpop.f32.mrb[0].mxu0
  %561 = vmatprep.mubr.bf16.mxu0 0
  %562 = vmatmul.mubr.bf16.gmra.mrb[0].mxu0 %v443
  %v563 = vpop.f32.mrb[0].mxu0
  %v564 = vadd.f32 %v471, %v563
  %v565 = vpop.f32.mrb[0].mxu0
  %v566 = vpop.f32.mrb[0].mxu0
  %v567 = vadd.f32 %v471, %v566
  %v568 = vpop.f32.mrb[0].mxu0
  %569 = vmatprep.mubr.bf16.mxu0 0
  %570 = vmatmul.mubr.bf16.gmra.mrb[0].mxu0 %v444
  %v571 = vpop.f32.mrb[0].mxu0
  %v572 = vadd.f32 %v471, %v571
  %v573 = vpop.f32.mrb[0].mxu0
  %v574 = vpop.f32.mrb[0].mxu0
  %v575 = vadd.f32 %v471, %v574
  %v576 = vpop.f32.mrb[0].mxu0
  %577 = vmatprep.mubr.bf16.mxu0 0
  %578 = vmatmul.mubr.bf16.gmra.mrb[0].mxu0 %v445
  %v579 = vpop.f32.mrb[0].mxu0
  %v580 = vadd.f32 %v471, %v579
  %v581 = vpop.f32.mrb[0].mxu0
  %v582 = vpop.f32.mrb[0].mxu0
  %v583 = vadd.f32 %v471, %v582
  %v584 = vpop.f32.mrb[0].mxu0
  %585 = vmatprep.mubr.bf16.mxu0 0
  %586 = vmatmul.mubr.bf16.gmra.mrb[0].mxu0 %v446
  %v587 = vpop.f32.mrb[0].mxu0
  %v588 = vadd.f32 %v471, %v587
  %v589 = vpop.f32.mrb[0].mxu0
  %v590 = vpop.f32.mrb[0].mxu0
  %v591 = vadd.f32 %v471, %v590
  %v592 = vpop.f32.mrb[0].mxu0
  %593 = vmatprep.mubr.bf16.mxu0 0
  %594 = vmatmul.mubr.bf16.gmra.mrb[0].mxu0 %v447
  %v595 = vpop.f32.mrb[0].mxu0
  %v596 = vadd.f32 %v471, %v595
  %v597 = vpop.f32.mrb[0].mxu0
  %v598 = vpop.f32.mrb[0].mxu0
  %v599 = vadd.f32 %v471, %v598
  %v600 = vpop.f32.mrb[0].mxu0
  %601 = vmatprep.mubr.bf16.mxu0 0
  %602 = vmatmul.mubr.bf16.gmra.mrb[0].mxu0 %v448
  %v603 = vpop.f32.mrb[0].mxu0
  %v604 = vadd.f32 %v471, %v603
  %v605 = vpop.f32.mrb[0].mxu0
  %v606 = vpop.f32.mrb[0].mxu0
  %v607 = vadd.f32 %v471, %v606
  %v608 = vpop.f32.mrb[0].mxu0
  %609 = vmatprep.mubr.bf16.mxu0 0
  %610 = vmatmul.mubr.bf16.gmra.mrb[0].mxu0 %v449
  %v611 = vpop.f32.mrb[0].mxu0
  %v612 = vadd.f32 %v471, %v611
  %v613 = vpop.f32.mrb[0].mxu0
  %v614 = vpop.f32.mrb[0].mxu0
  %v615 = vadd.f32 %v471, %v614
  %v616 = vpop.f32.mrb[0].mxu0
  %617 = vdwg.mxu0
  %v618 = vmax.f32 %v556, 0.0
  %v619 = vmax.f32 %v559, 0.0
  %v620 = vmax.f32 %v564, 0.0
  %v621 = vmax.f32 %v567, 0.0
  %v622 = vmax.f32 %v572, 0.0
  %v623 = vmax.f32 %v575, 0.0
  %v624 = vmax.f32 %v580, 0.0
  %v625 = vmax.f32 %v583, 0.0
  %v626 = vmax.f32 %v588, 0.0
  %v627 = vmax.f32 %v591, 0.0
  %v628 = vmax.f32 %v596, 0.0
  %v629 = vmax.f32 %v599, 0.0
  %v630 = vmax.f32 %v604, 0.0
  %v631 = vmax.f32 %v607, 0.0
  %v632 = vmax.f32 %v612, 0.0
  %v633 = vmax.f32 %v615, 0.0
  %v634 = vpack.c.bf16 %v619, %v618
  %v635 = vpack.c.bf16 %v621, %v620
  %v636 = vpack.c.bf16 %v623, %v622
  %v637 = vpack.c.bf16 %v625, %v624
  %v638 = vpack.c.bf16 %v627, %v626
  %v639 = vpack.c.bf16 %v629, %v628
  %v640 = vpack.c.bf16 %v631, %v630
  %v641 = vpack.c.bf16 %v633, %v632
  %v642 = vld [vmem:[%s7] sm:$0xf]
  %v643 = vld [vmem:[%s7 + $0x4] sm:$0xf]
  %v644 = vld [vmem:[%s7 + $0x8] sm:$0xf]
  %v645 = vld [vmem:[%s7 + $0xc] sm:$0xf]
  %v646 = vld [vmem:[%s7 + $0x10] sm:$0xf]
  %v647 = vld [vmem:[%s7 + $0x14] sm:$0xf]
  %v648 = vld [vmem:[%s7 + $0x18] sm:$0xf]
  %v649 = vld [vmem:[%s7 + $0x1c] sm:$0xf]
  %v650 = vld [vmem:[%s7 + $0x20] sm:$0xf]
  %v651 = vld [vmem:[%s7 + $0x24] sm:$0xf]
  %v652 = vld [vmem:[%s7 + $0x28] sm:$0xf]
  %v653 = vld [vmem:[%s7 + $0x2c] sm:$0xf]
  %v654 = vld [vmem:[%s7 + $0x30] sm:$0xf]
  %v655 = vld [vmem:[%s7 + $0x34] sm:$0xf]
  %v656 = vld [vmem:[%s7 + $0x38] sm:$0xf]
  %v657 = vld [vmem:[%s7 + $0x3c] sm:$0xf]
  %v658 = vld [vmem:[%s8] sm:$0x1]
  %v660 = vlaneseq
  %v661 = vshrl.u32 %v660, 7
  %v662 = vsub.s32 0, %v661
  %v663 = vrot.slane %v658, %v662
  %v681 = vunpack.c.l.b16 %v642
  %v682 = vunpack.c.l.b16 %v643
  %v683 = vunpack.c.l.b16 %v644
  %v684 = vunpack.c.l.b16 %v645
  %v685 = vunpack.c.l.b16 %v646
  %v686 = vunpack.c.l.b16 %v647
  %v687 = vunpack.c.l.b16 %v648
  %v688 = vunpack.c.l.b16 %v649
  %v689 = vunpack.c.l.b16 %v650
  %v690 = vunpack.c.l.b16 %v651
  %v691 = vunpack.c.l.b16 %v652
  %v692 = vunpack.c.l.b16 %v653
  %v693 = vunpack.c.l.b16 %v654
  %v694 = vunpack.c.l.b16 %v655
  %v695 = vunpack.c.l.b16 %v656
  %v696 = vunpack.c.l.b16 %v657
  %v697 = vpack.c.b16 %v682, %v681
  %v698 = vpack.c.b16 %v684, %v683
  %v699 = vpack.c.b16 %v686, %v685
  %v700 = vpack.c.b16 %v688, %v687
  %v701 = vpack.c.b16 %v690, %v689
  %v702 = vpack.c.b16 %v692, %v691
  %v703 = vpack.c.b16 %v694, %v693
  %v704 = vpack.c.b16 %v696, %v695
  %713 = vmatprep.subr.bf16.mxu0 0
  %714 = vmatpush1.bf16.msra.mxu0 %v697
  %715 = vmatprep.subr.bf16.mxu0 0
  %716 = vmatpush1.bf16.msra.mxu0 %v698
  %717 = vmatprep.subr.bf16.mxu0 0
  %718 = vmatpush1.bf16.msra.mxu0 %v699
  %719 = vmatprep.subr.bf16.mxu0 0
  %720 = vmatpush1.bf16.msra.mxu0 %v700
  %721 = vmatprep.subr.bf16.mxu0 0
  %722 = vmatpush1.bf16.msra.mxu0 %v701
  %723 = vmatprep.subr.bf16.mxu0 0
  %724 = vmatpush1.bf16.msra.mxu0 %v702
  %725 = vmatprep.subr.bf16.mxu0 0
  %726 = vmatpush1.bf16.msra.mxu0 %v703
  %727 = vmatprep.subr.bf16.mxu0 0
  %728 = vmatpush1.bf16.msra.mxu0 %v704
  %729 = vmatprep.subr.bf16.mxu0 0
  %730 = vmatpush1.bf16.msra.mxu0 0
  %731 = vmatprep.subr.bf16.mxu0 0
  %732 = vmatpush1.bf16.msra.mxu0 0
  %733 = vmatprep.subr.bf16.mxu0 0
  %734 = vmatpush1.bf16.msra.mxu0 0
  %735 = vmatprep.subr.bf16.mxu0 0
  %736 = vmatpush1.bf16.msra.mxu0 0
  %737 = vmatprep.subr.bf16.mxu0 0
  %738 = vmatpush1.bf16.msra.mxu0 0
  %739 = vmatprep.subr.bf16.mxu0 0
  %740 = vmatpush1.bf16.msra.mxu0 0
  %741 = vmatprep.subr.bf16.mxu0 0
  %742 = vmatpush1.bf16.msra.mxu0 0
  %743 = vmatprep.subr.bf16.mxu0 0
  %744 = vmatpush1.bf16.msra.mxu0 0
  %745 = vmatprep.mubr.bf16.mxu0 0
  %746 = vmatmul.mubr.bf16.gmra.mrb[0].mxu0 %v634
  %v747 = vpop.f32.mrb[0].mxu0
  %v748 = vadd.f32 %v663, %v747
  %v749 = vpop.f32.mrb[0].mxu0
  %v750 = vpop.f32.mrb[0].mxu0
  %v751 = vadd.f32 %v663, %v750
  %v752 = vpop.f32.mrb[0].mxu0
  %753 = vmatprep.mubr.bf16.mxu0 0
  %754 = vmatmul.mubr.bf16.gmra.mrb[0].mxu0 %v635
  %v755 = vpop.f32.mrb[0].mxu0
  %v756 = vadd.f32 %v663, %v755
  %v757 = vpop.f32.mrb[0].mxu0
  %v758 = vpop.f32.mrb[0].mxu0
  %v759 = vadd.f32 %v663, %v758
  %v760 = vpop.f32.mrb[0].mxu0
  %761 = vmatprep.mubr.bf16.mxu0 0
  %762 = vmatmul.mubr.bf16.gmra.mrb[0].mxu0 %v636
  %v763 = vpop.f32.mrb[0].mxu0
  %v764 = vadd.f32 %v663, %v763
  %v765 = vpop.f32.mrb[0].mxu0
  %v766 = vpop.f32.mrb[0].mxu0
  %v767 = vadd.f32 %v663, %v766
  %v768 = vpop.f32.mrb[0].mxu0
  %769 = vmatprep.mubr.bf16.mxu0 0
  %770 = vmatmul.mubr.bf16.gmra.mrb[0].mxu0 %v637
  %v771 = vpop.f32.mrb[0].mxu0
  %v772 = vadd.f32 %v663, %v771
  %v773 = vpop.f32.mrb[0].mxu0
  %v774 = vpop.f32.mrb[0].mxu0
  %v775 = vadd.f32 %v663, %v774
  %v776 = vpop.f32.mrb[0].mxu0
  %777 = vmatprep.mubr.bf16.mxu0 0
  %778 = vmatmul.mubr.bf16.gmra.mrb[0].mxu0 %v638
  %v779 = vpop.f32.mrb[0].mxu0
  %v780 = vadd.f32 %v663, %v779
  %v781 = vpop.f32.mrb[0].mxu0
  %v782 = vpop.f32.mrb[0].mxu0
  %v783 = vadd.f32 %v663, %v782
  %v784 = vpop.f32.mrb[0].mxu0
  %785 = vmatprep.mubr.bf16.mxu0 0
  %786 = vmatmul.mubr.bf16.gmra.mrb[0].mxu0 %v639
  %v787 = vpop.f32.mrb[0].mxu0
  %v788 = vadd.f32 %v663, %v787
  %v789 = vpop.f32.mrb[0].mxu0
  %v790 = vpop.f32.mrb[0].mxu0
  %v791 = vadd.f32 %v663, %v790
  %v792 = vpop.f32.mrb[0].mxu0
  %793 = vmatprep.mubr.bf16.mxu0 0
  %794 = vmatmul.mubr.bf16.gmra.mrb[0].mxu0 %v640
  %v795 = vpop.f32.mrb[0].mxu0
  %v796 = vadd.f32 %v663, %v795
  %v797 = vpop.f32.mrb[0].mxu0
  %v798 = vpop.f32.mrb[0].mxu0
  %v799 = vadd.f32 %v663, %v798
  %v800 = vpop.f32.mrb[0].mxu0
  %801 = vmatprep.mubr.bf16.mxu0 0
  %802 = vmatmul.mubr.bf16.gmra.mrb[0].mxu0 %v641
  %v803 = vpop.f32.mrb[0].mxu0
  %v804 = vadd.f32 %v663, %v803
  %v805 = vpop.f32.mrb[0].mxu0
  %v806 = vpop.f32.mrb[0].mxu0
  %v807 = vadd.f32 %v663, %v806
  %v808 = vpop.f32.mrb[0].mxu0
  %809 = vdwg.mxu0
  %vm810 = vcmask 64512
  %811 = vst.msk [vmem:[%s9] sm:$0xff] %vm810, %v748
  %812 = vst.msk [vmem:[%s9 + $0x8] sm:$0xff] %vm810, %v751
  %813 = vst.msk [vmem:[%s9 + $0x10] sm:$0xff] %vm810, %v756
  %814 = vst.msk [vmem:[%s9 + $0x18] sm:$0xff] %vm810, %v759
  %815 = vst.msk [vmem:[%s9 + $0x20] sm:$0xff] %vm810, %v764
  %816 = vst.msk [vmem:[%s9 + $0x28] sm:$0xff] %vm810, %v767
  %817 = vst.msk [vmem:[%s9 + $0x30] sm:$0xff] %vm810, %v772
  %818 = vst.msk [vmem:[%s9 + $0x38] sm:$0xff] %vm810, %v775
  %819 = vst.msk [vmem:[%s9 + $0x40] sm:$0xff] %vm810, %v780
  %820 = vst.msk [vmem:[%s9 + $0x48] sm:$0xff] %vm810, %v783
  %821 = vst.msk [vmem:[%s9 + $0x50] sm:$0xff] %vm810, %v788
  %822 = vst.msk [vmem:[%s9 + $0x58] sm:$0xff] %vm810, %v791
  %823 = vst.msk [vmem:[%s9 + $0x60] sm:$0xff] %vm810, %v796
  %824 = vst.msk [vmem:[%s9 + $0x68] sm:$0xff] %vm810, %v799
  %825 = vst.msk [vmem:[%s9 + $0x70] sm:$0xff] %vm810, %v804
  %826 = vst.msk [vmem:[%s9 + $0x78] sm:$0xff] %vm810, %v807
  // Predicated region
  $region38: #{tpu_custom_call.1} parent=0 // pred_check
    _
  $region39: #{tpu_custom_call.1} parent=0 // pred_check_branch
    %828 = sbr.rel (0) target = $region41
  $region40: #{tpu_custom_call.1} parent=0 // pred_region
    _
  $region41: #{tpu_custom_call.1} parent=0 // pred_fallthru
    _
  // Predicated region
  $region42: #{tpu_custom_call.1} parent=0 // pred_check
    _
  $region43: #{tpu_custom_call.1} parent=0 // pred_check_branch
    %830 = sbr.rel (0) target = $region45
  $region44: #{tpu_custom_call.1} parent=0 // pred_region
    _
  $region45: #{tpu_custom_call.1} parent=0 // pred_fallthru
    _

</llo_original>
